<compile_context>
chip_gen: v5e
topology: v5e:2x2
jax: 0.10.0
libtpu: 0.0.40
codegen_flags: <defaults>
</compile_context>

<pallas_src>
import jax
import jax.numpy as jnp
from jax.experimental import pallas as pl
from jax.experimental.pallas import tpu as pltpu


def _round_up(n: int, m: int) -> int:
    return ((n + m - 1) // m) * m


def _make_encoder_kernel(num_hidden_layers: int):
    """Pallas kernel closed over the (static) number of Linear+ReLU layers.

    Ref order:
      x, cond,
      w0_x (bf16), w0_c (bf16), b0 (f32),
      [w_i (bf16), b_i (f32)] * (num_hidden_layers - 1),
      w_head (bf16, mean||logvar fused), b_head (f32),
      out (f32, (TB, 2*latent))
    """

    def kernel(x_ref, c_ref, *refs):
        # --- layer 0: split-weight matmul replaces the host-side concat -------
        w0x = refs[0][...]
        w0c = refs[1][...]
        b0 = refs[2][...]
        h = (
            jnp.dot(x_ref[...].astype(jnp.bfloat16), w0x,
                    preferred_element_type=jnp.float32)
            + jnp.dot(c_ref[...].astype(jnp.bfloat16), w0c,
                      preferred_element_type=jnp.float32)
            + b0
        )
        h = jnp.maximum(h, 0.0)

        # --- remaining hidden layers ------------------------------------------
        idx = 3
        for _ in range(num_hidden_layers - 1):
            w = refs[idx][...]
            b = refs[idx + 1][...]
            idx += 2
            h = jnp.dot(h.astype(jnp.bfloat16), w,
                        preferred_element_type=jnp.float32) + b
            h = jnp.maximum(h, 0.0)

        # --- fused mean || log_var head: one matmul, one wider store ----------
        w_head = refs[idx][...]
        b_head = refs[idx + 1][...]
        out_ref = refs[idx + 2]
        out_ref[...] = (
            jnp.dot(h.astype(jnp.bfloat16), w_head,
                    preferred_element_type=jnp.float32) + b_head
        )

    return kernel


def encoder_forward(x, condition, params, input_size, *, batch_tile=512):
    """Conditional-VAE encoder forward via one batch-tiled Pallas kernel.

    params: dict with
      'mlp'   : list of (W[in, out], b[1, out]) f32 tuples (torch layout transposed)
      'mean'  : (W[hidden, latent], b[1, latent])
      'logvar': (W[hidden, latent], b[1, latent])
    Returns (mean, log_var), each (B, latent) f32.
    """
    x_flat = x.reshape(-1, input_size).astype(jnp.float32)
    cond = condition.astype(jnp.float32)

    batch = x_flat.shape[0]
    num_cond = cond.shape[1]
    latent = params["mean"][0].shape[1]
    mlp = params["mlp"]
    num_hidden = len(mlp)

    # ---- parameter preparation (one-time, wrapper side) ----------------------
    # Split W0 so the kernel consumes x and condition separately (no HBM concat).
    w0, b0 = mlp[0]
    flat_params = [
        w0[:input_size, :].astype(jnp.bfloat16),   # w0_x
        w0[input_size:, :].astype(jnp.bfloat16),   # w0_c
        b0.astype(jnp.float32),
    ]
    for w, b in mlp[1:]:
        flat_params += [w.astype(jnp.bfloat16), b.astype(jnp.float32)]
    # Fuse the mean / log_var heads into one [hidden, 2*latent] weight + bias.
    w_head = jnp.concatenate([params["mean"][0], params["logvar"][0]],
                             axis=1).astype(jnp.bfloat16)
    b_head = jnp.concatenate([params["mean"][1], params["logvar"][1]],
                             axis=1).astype(jnp.float32)
    flat_params += [w_head, b_head]

    # ---- batch-tiled grid -----------------------------------------------------
    tb = min(_round_up(batch_tile, 8), max(8, _round_up(batch, 8)))
    grid = (pl.cdiv(batch, tb),)

    x_spec = pl.BlockSpec((tb, input_size), lambda i: (i, 0))
    c_spec = pl.BlockSpec((tb, num_cond), lambda i: (i, 0))
    # Full-array weight blocks with a constant index_map stay VMEM-resident
    # across batch-grid iterations -> weight HBM traffic is paid once.
    param_specs = [pl.BlockSpec(p.shape, lambda i: (0, 0)) for p in flat_params]
    out_spec = pl.BlockSpec((tb, 2 * latent), lambda i: (i, 0))

    # ---- cost hint for XLA scheduling around this tiny custom call -----------
    widths = [input_size + num_cond] + [w.shape[1] for w, _ in mlp] + [2 * latent]
    flops = int(2 * batch * sum(k * n for k, n in zip(widths[:-1], widths[1:])))
    bytes_accessed = int(
        x_flat.size * 4 + cond.size * 4
        + sum(int(p.size) * p.dtype.itemsize for p in flat_params)
        + batch * 2 * latent * 4
    )
    cost = pl.CostEstimate(flops=flops, transcendentals=0,
                           bytes_accessed=bytes_accessed)

    kernel = _make_encoder_kernel(num_hidden)

    fused = pl.pallas_call(
        kernel,
        out_shape=jax.ShapeDtypeStruct((batch, 2 * latent), jnp.float32),
        grid=grid,
        in_specs=[x_spec, c_spec] + param_specs,
        out_specs=out_spec,
        compiler_params=pltpu.CompilerParams(
            dimension_semantics=("parallel",)),
        cost_estimate=cost,
    )(x_flat, cond, *flat_params)

    mean = fused[:, :latent]
    log_var = fused[:, latent:]
    return mean, log_var


def init_encoder_params(key, layer_sizes, latent_size, num_conditions):
    """Deterministic synthetic params, same shapes as the torch module.

    Mirrors the torch-side mutation layer_sizes[0] += num_conditions.
    Weights stored [in_features, out_features]; biases [1, out_features]; f32.
    """
    sizes = list(layer_sizes)
    sizes[0] += num_conditions

    params = {"mlp": []}
    for in_size, out_size in zip(sizes[:-1], sizes[1:]):
        key, kw, kb = jax.random.split(key, 3)
        w = jax.random.normal(kw, (in_size, out_size), jnp.float32) * 0.05
        b = jax.random.normal(kb, (1, out_size), jnp.float32) * 0.05
        params["mlp"].append((w, b))

    last = sizes[-1]
    key, kw, kb = jax.random.split(key, 3)
    params["mean"] = (
        jax.random.normal(kw, (last, latent_size), jnp.float32) * 0.05,
        jax.random.normal(kb, (1, latent_size), jnp.float32) * 0.05,
    )
    key, kw, kb = jax.random.split(key, 3)
    params["logvar"] = (
        jax.random.normal(kw, (last, latent_size), jnp.float32) * 0.05,
        jax.random.normal(kb, (1, latent_size), jnp.float32) * 0.05,
    )
    return params


def _reference_forward_f32(x, condition, params, input_size):
    """Pure-f32 JAX reference (exact torch semantics)."""
    h = jnp.concatenate([x.reshape(-1, input_size), condition], axis=-1)
    for w, b in params["mlp"]:
        h = jnp.maximum(h @ w + b, 0.0)
    mean = h @ params["mean"][0] + params["mean"][1]
    log_var = h @ params["logvar"][0] + params["logvar"][1]
    return mean, log_var


def _reference_forward_bf16(x, condition, params, input_size):
    """Reference that mimics the kernel's bf16-matmul / f32-accumulate numerics."""
    def mm(a, w):
        return jnp.dot(a.astype(jnp.bfloat16), w.astype(jnp.bfloat16),
                       preferred_element_type=jnp.float32)

    xf = x.reshape(-1, input_size).astype(jnp.float32)
    c = condition.astype(jnp.float32)
    w0, b0 = params["mlp"][0]
    h = jnp.maximum(mm(xf, w0[:input_size]) + mm(c, w0[input_size:]) + b0, 0.0)
    for w, b in params["mlp"][1:]:
        h = jnp.maximum(mm(h, w) + b, 0.0)
    mean = mm(h, params["mean"][0]) + params["mean"][1]
    log_var = mm(h, params["logvar"][0]) + params["logvar"][1]
    return mean, log_var


if __name__ == "__main__":
    # Small shapes consistent with the module:
    #   layer_sizes = [64, 32] -> input_size = 64, one hidden Linear+ReLU (68 -> 32)
    #   latent_size = 8, num_conditions = 4
    layer_sizes = [64, 32]
    latent_size = 8
    num_conditions = 4
    input_size = layer_sizes[0]

    batch = 2
    key = jax.random.PRNGKey(0)
    k_x, k_c, k_p = jax.random.split(key, 3)

    # Torch-style NCHW image input: (B, C, H, W) = (2, 1, 8, 8) -> flattened to 64.
    x = jax.random.normal(k_x, (batch, 1, 8, 8), jnp.float32)
    condition = jax.random.normal(k_c, (batch, num_conditions), jnp.float32)

    params = init_encoder_params(k_p, layer_sizes, latent_size, num_conditions)

    mean, log_var = encoder_forward(x, condition, params, input_size)
    jax.block_until_ready((mean, log_var))

    assert mean.shape == (batch, latent_size)
    assert log_var.shape == (batch, latent_size)

    # Tight check vs a bf16-matmul reference matching the kernel's numerics.
    ref_m_bf, ref_lv_bf = _reference_forward_bf16(x, condition, params, input_size)
    assert jnp.allclose(mean, ref_m_bf, atol=1e-2, rtol=1e-2)
    assert jnp.allclose(log_var, ref_lv_bf, atol=1e-2, rtol=1e-2)

    # Loose semantic check vs the pure-f32 reference (difference is bf16 rounding).
    ref_m, ref_lv = _reference_forward_f32(x, condition, params, input_size)
    assert jnp.allclose(mean, ref_m, atol=5e-2, rtol=5e-2)
    assert jnp.allclose(log_var, ref_lv, atol=5e-2, rtol=5e-2)

    print("KERNEL_OK")
</pallas_src>

<mosaic_0001>
module attributes {stable_mosaic.version = 11 : i64} {
  func.func @kernel(%arg0: i32, %arg1: memref<8x64xf32, #tpu.memory_space<vmem>>, %arg2: memref<8x4xf32, #tpu.memory_space<vmem>>, %arg3: memref<64x32xbf16, #tpu.memory_space<vmem>>, %arg4: memref<4x32xbf16, #tpu.memory_space<vmem>>, %arg5: memref<1x32xf32, #tpu.memory_space<vmem>>, %arg6: memref<32x16xbf16, #tpu.memory_space<vmem>>, %arg7: memref<1x16xf32, #tpu.memory_space<vmem>>, %arg8: memref<8x16xf32, #tpu.memory_space<vmem>>) attributes {dimension_semantics = [#tpu.dimension_semantics<parallel>], iteration_bounds = array<i64: 1>, scalar_prefetch = 0 : i64, scratch_operands = 0 : i64, tpu.core_type = #tpu.core_type<tc>, window_params = [{transform_indices = @transform_0, window_bounds = array<i64: 8, 64>}, {transform_indices = @transform_1, window_bounds = array<i64: 8, 4>}, {pipeline_mode = #tpu.pipeline_mode<synchronous>, transform_indices = @transform_2, window_bounds = array<i64: 64, 32>}, {pipeline_mode = #tpu.pipeline_mode<synchronous>, transform_indices = @transform_3, window_bounds = array<i64: 4, 32>}, {pipeline_mode = #tpu.pipeline_mode<synchronous>, transform_indices = @transform_4, window_bounds = array<i64: 1, 32>}, {pipeline_mode = #tpu.pipeline_mode<synchronous>, transform_indices = @transform_5, window_bounds = array<i64: 32, 16>}, {pipeline_mode = #tpu.pipeline_mode<synchronous>, transform_indices = @transform_6, window_bounds = array<i64: 1, 16>}, {transform_indices = @transform_7, window_bounds = array<i64: 8, 16>}]} {
    %c0 = arith.constant 0 : index
    %c0_0 = arith.constant 0 : index
    %0 = vector.load %arg3[%c0, %c0_0] : memref<64x32xbf16, #tpu.memory_space<vmem>>, vector<64x32xbf16>
    %c0_1 = arith.constant 0 : index
    %c0_2 = arith.constant 0 : index
    %1 = vector.load %arg4[%c0_1, %c0_2] : memref<4x32xbf16, #tpu.memory_space<vmem>>, vector<4x32xbf16>
    %c0_3 = arith.constant 0 : index
    %c0_4 = arith.constant 0 : index
    %2 = vector.load %arg5[%c0_3, %c0_4] : memref<1x32xf32, #tpu.memory_space<vmem>>, vector<1x32xf32>
    %c0_5 = arith.constant 0 : index
    %c0_6 = arith.constant 0 : index
    %3 = vector.load %arg1[%c0_5, %c0_6] : memref<8x64xf32, #tpu.memory_space<vmem>>, vector<8x64xf32>
    %4 = arith.truncf %3 : vector<8x64xf32> to vector<8x64xbf16>
    %cst = arith.constant dense<0.000000e+00> : vector<8x32xf32>
    %5 = tpu.matmul %4, %0, %cst {dimension_numbers = #tpu.dot_dimension_numbers<[1], [0], [0], [1], [0, 0, 1, 1], [], []>} : vector<8x64xbf16>, vector<64x32xbf16>, vector<8x32xf32> -> vector<8x32xf32>
    %c0_7 = arith.constant 0 : index
    %c0_8 = arith.constant 0 : index
    %6 = vector.load %arg2[%c0_7, %c0_8] : memref<8x4xf32, #tpu.memory_space<vmem>>, vector<8x4xf32>
    %7 = arith.truncf %6 : vector<8x4xf32> to vector<8x4xbf16>
    %cst_9 = arith.constant dense<0.000000e+00> : vector<8x32xf32>
    %8 = tpu.matmul %7, %1, %cst_9 {dimension_numbers = #tpu.dot_dimension_numbers<[1], [0], [0], [1], [0, 0, 1, 1], [], []>} : vector<8x4xbf16>, vector<4x32xbf16>, vector<8x32xf32> -> vector<8x32xf32>
    %9 = arith.addf %5, %8 : vector<8x32xf32>
    %10 = vector.broadcast %2 : vector<1x32xf32> to vector<8x32xf32>
    %11 = arith.addf %9, %10 : vector<8x32xf32>
    %cst_10 = arith.constant 0.000000e+00 : f32
    %12 = vector.broadcast %cst_10 : f32 to vector<8x32xf32>
    %13 = arith.maximumf %11, %12 : vector<8x32xf32>
    %c0_11 = arith.constant 0 : index
    %c0_12 = arith.constant 0 : index
    %14 = vector.load %arg6[%c0_11, %c0_12] : memref<32x16xbf16, #tpu.memory_space<vmem>>, vector<32x16xbf16>
    %c0_13 = arith.constant 0 : index
    %c0_14 = arith.constant 0 : index
    %15 = vector.load %arg7[%c0_13, %c0_14] : memref<1x16xf32, #tpu.memory_space<vmem>>, vector<1x16xf32>
    %16 = arith.truncf %13 : vector<8x32xf32> to vector<8x32xbf16>
    %cst_15 = arith.constant dense<0.000000e+00> : vector<8x16xf32>
    %17 = tpu.matmul %16, %14, %cst_15 {dimension_numbers = #tpu.dot_dimension_numbers<[1], [0], [0], [1], [0, 0, 1, 1], [], []>} : vector<8x32xbf16>, vector<32x16xbf16>, vector<8x16xf32> -> vector<8x16xf32>
    %18 = vector.broadcast %15 : vector<1x16xf32> to vector<8x16xf32>
    %19 = arith.addf %17, %18 : vector<8x16xf32>
    %c0_16 = arith.constant 0 : index
    %c0_17 = arith.constant 0 : index
    %20 = vector.load %arg8[%c0_16, %c0_17] : memref<8x16xf32, #tpu.memory_space<vmem>>, vector<8x16xf32>
    tpu.vector_store %arg8[%c0_16, %c0_17], %19 {strides = array<i32>} : memref<8x16xf32, #tpu.memory_space<vmem>>, vector<8x16xf32>,
    return
  }
  func.func @transform_0(%arg0: i32) -> (i32, i32) {
    %c0_i32 = arith.constant 0 : i32
    %c0_i32_0 = arith.constant 0 : i32
    return %arg0, %c0_i32 : i32, i32
  }
  func.func @transform_1(%arg0: i32) -> (i32, i32) {
    %c0_i32 = arith.constant 0 : i32
    %c0_i32_0 = arith.constant 0 : i32
    return %arg0, %c0_i32 : i32, i32
  }
  func.func @transform_2(%arg0: i32) -> (i32, i32) {
    %c0_i32 = arith.constant 0 : i32
    %c0_i32_0 = arith.constant 0 : i32
    %c0_i32_1 = arith.constant 0 : i32
    return %c0_i32, %c0_i32_0 : i32, i32
  }
  func.func @transform_3(%arg0: i32) -> (i32, i32) {
    %c0_i32 = arith.constant 0 : i32
    %c0_i32_0 = arith.constant 0 : i32
    %c0_i32_1 = arith.constant 0 : i32
    return %c0_i32, %c0_i32_0 : i32, i32
  }
  func.func @transform_4(%arg0: i32) -> (i32, i32) {
    %c0_i32 = arith.constant 0 : i32
    %c0_i32_0 = arith.constant 0 : i32
    %c0_i32_1 = arith.constant 0 : i32
    return %c0_i32, %c0_i32_0 : i32, i32
  }
  func.func @transform_5(%arg0: i32) -> (i32, i32) {
    %c0_i32 = arith.constant 0 : i32
    %c0_i32_0 = arith.constant 0 : i32
    %c0_i32_1 = arith.constant 0 : i32
    return %c0_i32, %c0_i32_0 : i32, i32
  }
  func.func @transform_6(%arg0: i32) -> (i32, i32) {
    %c0_i32 = arith.constant 0 : i32
    %c0_i32_0 = arith.constant 0 : i32
    %c0_i32_1 = arith.constant 0 : i32
    return %c0_i32, %c0_i32_0 : i32, i32
  }
  func.func @transform_7(%arg0: i32) -> (i32, i32) {
    %c0_i32 = arith.constant 0 : i32
    %c0_i32_0 = arith.constant 0 : i32
    return %arg0, %c0_i32 : i32, i32
  }
}

</mosaic_0001>

<llo_original>
// kernel: tpu_custom_call.1
$region0: #{tpu_custom_call.1}
  #allocation0 [shape = 'u32[]', space=smem, size = 0x4, offset = 0x4, fixed_abs, tag = 'smem constant byte address 0x4 - core index']
  #allocation1 [shape = 'u32[72,128]{1,0:T(1,128)}', space=vmem, size = 0x9000, scoped, tag = 'internal scratch']
  %s0 = inlined_call_operand.vmem [shape: f32[2,64], index: 0, kind: input, shape index: {}]
  %s1 = inlined_call_operand.vmem [shape: f32[2,4], index: 1, kind: input, shape index: {}]
  %s2 = inlined_call_operand.vmem [shape: bf16[64,32], index: 2, kind: input, shape index: {}]
  %s3 = inlined_call_operand.vmem [shape: bf16[4,32], index: 3, kind: input, shape index: {}]
  %s4 = inlined_call_operand.vmem [shape: f32[1,32], index: 4, kind: input, shape index: {}]
  %s5 = inlined_call_operand.vmem [shape: bf16[32,16], index: 5, kind: input, shape index: {}]
  %s6 = inlined_call_operand.vmem [shape: f32[1,16], index: 6, kind: input, shape index: {}]
  %s7 = inlined_call_operand.hbm [shape: f32[2,16], index: 7, kind: output, shape index: {}]
  %s8 = sld [smem:[#allocation0]]
  $region38: #{tpu_custom_call.1} parent=0
    _
  %s10 = ssub.s32 1, %s8
  %s11 = scalar_select 0, %s10, %s8
  $region1: #{tpu_custom_call.1} parent=0
    #allocation2 [shape = 'u8[4096]{0}', space=vmem, size = 0x1000, scoped, tag = 'output window, operand 0, single buffered']
    #allocation3 [shape = 's32[1]{0}', space=sflag, size = 0x4, scoped, tag = 'scoped memory for tpu_custom_call.1']
    %12 = vsyncpa [#allocation3], 0
    // Predicated region
    $region2: #{tpu_custom_call.1} parent=1 // pred_check
      _
    $region3: #{tpu_custom_call.1} parent=1 // pred_check_branch
      %14 = sbr.rel (0) target = $region5
    $region4: #{tpu_custom_call.1} parent=1 // pred_region
      _
    $region5: #{tpu_custom_call.1} parent=1 // pred_fallthru
      _
    // Predicated region
    $region6: #{tpu_custom_call.1} parent=1 // pred_check
      _
    $region7: #{tpu_custom_call.1} parent=1 // pred_check_branch
      %16 = sbr.rel (0) target = $region9
    $region8: #{tpu_custom_call.1} parent=1 // pred_region
      _
    $region9: #{tpu_custom_call.1} parent=1 // pred_fallthru
      _
    // Predicated region
    $region10: #{tpu_custom_call.1} parent=1 // pred_check
      _
    $region11: #{tpu_custom_call.1} parent=1 // pred_check_branch
      %18 = sbr.rel (0) target = $region13
    $region12: #{tpu_custom_call.1} parent=1 // pred_region
      _
    $region13: #{tpu_custom_call.1} parent=1 // pred_fallthru
      _
    // Predicated region
    $region14: #{tpu_custom_call.1} parent=1 // pred_check
      _
    $region15: #{tpu_custom_call.1} parent=1 // pred_check_branch
      %20 = sbr.rel (0) target = $region17
    $region16: #{tpu_custom_call.1} parent=1 // pred_region
      _
    $region17: #{tpu_custom_call.1} parent=1 // pred_fallthru
      _
    // Predicated region
    $region18: #{tpu_custom_call.1} parent=1 // pred_check
      _
    $region19: #{tpu_custom_call.1} parent=1 // pred_check_branch
      %22 = sbr.rel (0) target = $region21
    $region20: #{tpu_custom_call.1} parent=1 // pred_region
      _
    $region21: #{tpu_custom_call.1} parent=1 // pred_fallthru
      _
    // Predicated region
    $region22: #{tpu_custom_call.1} parent=1 // pred_check
      _
    $region23: #{tpu_custom_call.1} parent=1 // pred_check_branch
      %24 = sbr.rel (0) target = $region25
    $region24: #{tpu_custom_call.1} parent=1 // pred_region
      _
    $region25: #{tpu_custom_call.1} parent=1 // pred_fallthru
      _
    // Predicated region
    $region26: #{tpu_custom_call.1} parent=1 // pred_check
      _
    $region27: #{tpu_custom_call.1} parent=1 // pred_check_branch
      %26 = sbr.rel (0) target = $region29
    $region28: #{tpu_custom_call.1} parent=1 // pred_region
      _
    $region29: #{tpu_custom_call.1} parent=1 // pred_fallthru
      _
    %v28 = vld [vmem:[%s2] sm:$0xf]
    %v29 = vld [vmem:[%s2 + $0x4] sm:$0xf]
    %v30 = vld [vmem:[%s2 + $0x8] sm:$0xf]
    %v31 = vld [vmem:[%s2 + $0xc] sm:$0xf]
    %v32 = vld [vmem:[%s2 + $0x10] sm:$0xf]
    %v33 = vld [vmem:[%s2 + $0x14] sm:$0xf]
    %v34 = vld [vmem:[%s2 + $0x18] sm:$0xf]
    %v35 = vld [vmem:[%s2 + $0x1c] sm:$0xf]
    %v36 = vld [vmem:[%s3] sm:$0x3]
    %v37 = vld [vmem:[%s4] sm:$0x1]
    %v38 = vld [vmem:[%s0] sm:$0xff]
    %v39 = vpack.c.bf16 %v38, %v38
    %v40 = vld [vmem:[%s1] sm:$0xff]
    %v41 = vpack.c.bf16 %v40, %v40
    %vm42 = vcmask 31744
    %v44 = vsel %vm42, %v41, 0
    %vm46 = vcmask 1041408
    %v48 = vsel %vm46, %v36, 0
    %50 = vmatpush.bf16.msra.mxu0 0
    %51 = vmatpush.bf16.msra.mxu0 0
    %52 = vmatpush.bf16.msra.mxu0 0
    %53 = vmatpush.bf16.msra.mxu0 0
    %54 = vmatpush.bf16.msra.mxu0 0
    %55 = vmatpush.bf16.msra.mxu0 0
    %56 = vmatpush.bf16.msra.mxu0 0
    %57 = vmatpush.bf16.msra.mxu0 %v48
    %58 = vmatmul.bf16.gmra.mxu0 %v44
    %v59 = vpop.f32.mrf.mxu0
    %v60 = vadd.f32 0.0, %v59
    %v61 = vpop.f32.mrf.mxu0
    %62 = vdwg.mxu0
    %v71 = vunpack.c.l.b16 %v28
    %v72 = vunpack.c.l.b16 %v29
    %v73 = vunpack.c.l.b16 %v30
    %v74 = vunpack.c.l.b16 %v31
    %v75 = vunpack.c.l.b16 %v32
    %v76 = vunpack.c.l.b16 %v33
    %v77 = vunpack.c.l.b16 %v34
    %v78 = vunpack.c.l.b16 %v35
    %v79 = vpack.c.b16 %v72, %v71
    %v80 = vpack.c.b16 %v74, %v73
    %v81 = vpack.c.b16 %v76, %v75
    %v82 = vpack.c.b16 %v78, %v77
    %vm87 = vcmask 523264
    %v89 = vsel %vm87, %v39, 0
    %91 = vmatpush.bf16.msra.mxu0 0
    %92 = vmatpush.bf16.msra.mxu0 0
    %93 = vmatpush.bf16.msra.mxu0 0
    %94 = vmatpush.bf16.msra.mxu0 0
    %95 = vmatpush.bf16.msra.mxu0 %v82
    %96 = vmatpush.bf16.msra.mxu0 %v81
    %97 = vmatpush.bf16.msra.mxu0 %v80
    %98 = vmatpush.bf16.msra.mxu0 %v79
    %99 = vmatmul.bf16.gmra.mxu0 %v89
    %v100 = vpop.f32.mrf.mxu0
    %v101 = vadd.f32 %v60, %v100
    %v102 = vpop.f32.mrf.mxu0
    %103 = vdwg.mxu0
    %v105 = vperm.slane %v37, 0
    %v107 = vadd.f32 %v101, %v105
    %v108 = vmax.f32 %v107, 0.0
    %v109 = vld [vmem:[%s5] sm:$0xf]
    %v110 = vld [vmem:[%s5 + $0x4] sm:$0xf]
    %v111 = vld [vmem:[%s5 + $0x8] sm:$0xf]
    %v112 = vld [vmem:[%s5 + $0xc] sm:$0xf]
    %v113 = vld [vmem:[%s6] sm:$0x1]
    %v114 = vpack.c.bf16 %v108, %v108
    %v116 = vperm.slane %v113, 0
    %v122 = vunpack.c.l.b16 %v109
    %v123 = vunpack.c.l.b16 %v110
    %v124 = vunpack.c.l.b16 %v111
    %v125 = vunpack.c.l.b16 %v112
    %v126 = vpack.c.b16 %v123, %v122
    %v127 = vpack.c.b16 %v125, %v124
    %vm130 = vcmask 261120
    %v132 = vsel %vm130, %v114, 0
    %134 = vmatpush.bf16.msra.mxu0 0
    %135 = vmatpush.bf16.msra.mxu0 0
    %136 = vmatpush.bf16.msra.mxu0 0
    %137 = vmatpush.bf16.msra.mxu0 0
    %138 = vmatpush.bf16.msra.mxu0 0
    %139 = vmatpush.bf16.msra.mxu0 0
    %140 = vmatpush.bf16.msra.mxu0 %v127
    %141 = vmatpush.bf16.msra.mxu0 %v126
    %142 = vmatmul.bf16.gmra.mxu0 %v132
    %v143 = vpop.f32.mrf.mxu0
    %v144 = vadd.f32 %v116, %v143
    %v145 = vpop.f32.mrf.mxu0
    %146 = vdwg.mxu0
    %vm147 = vcmask 130048
    %148 = vst.msk [vmem:[#allocation2] sm:$0xff] %vm147, %v144
    // Predicated region
    $region30: #{tpu_custom_call.1} parent=1 // pred_check
      _
    $region31: #{tpu_custom_call.1} parent=1 // pred_check_branch
      %150 = sbr.rel (0) target = $region33
    $region32: #{tpu_custom_call.1} parent=1 // pred_region
      %152 = vsyncadd [#allocation3], 96
      %s153 = sshll.u32 [#allocation2], 4
      %s154 = int_to_ptr.vmem [resolvable:$true] %s153
      %s155 = sshll.u32 %s7, 4
      %s156 = int_to_ptr.hbm [resolvable:$true] %s155
      %161 = dma.vmem_to_hbm [thread:$0]  %s154, 32, %s156, [#allocation3], 32, 32, 2
    $region33: #{tpu_custom_call.1} parent=1 // pred_fallthru
      _
    // Predicated region
    $region34: #{tpu_custom_call.1} parent=1 // pred_check
      _
    $region35: #{tpu_custom_call.1} parent=1 // pred_check_branch
      %163 = sbr.rel (0) target = $region37
    $region36: #{tpu_custom_call.1} parent=1 // pred_region
      %165 = dma.done [#allocation3], 128
    $region37: #{tpu_custom_call.1} parent=1 // pred_fallthru
      _
    %166 = vsyncpa [#allocation3], 1

</llo_original>
